<compile_context>
chip_gen: v6e
topology: v6e:2x2x1
jax: 0.10.0
libtpu: 0.0.40
codegen_flags: <defaults>
</compile_context>

<pallas_src>
import functools

import jax
import jax.numpy as jnp
from jax.experimental import pallas as pl
from jax.experimental.pallas import tpu as pltpu


def _bce_kernel(x_ref, y_ref, w_ref, o_ref, acc_ref, *, inv_n):
    s = pl.program_id(1)

    @pl.when(s == 0)
    def _init():
        acc_ref[...] = jnp.zeros_like(acc_ref)

    x = x_ref[...].astype(jnp.float32)
    y = y_ref[...].astype(jnp.float32)
    # Numerically stable elementwise BCE-with-logits, accumulated in f32.
    acc_ref[...] += jnp.maximum(x, 0.0) - x * y + jnp.log1p(jnp.exp(-jnp.abs(x)))

    @pl.when(s == pl.num_programs(1) - 1)
    def _finalize():
        per_class = jnp.sum(acc_ref[...], axis=1, keepdims=True)   # (C, 1)
        partial = jnp.sum(w_ref[...] * per_class) * inv_n          # scalar
        o_ref[...] = jnp.broadcast_to(partial, o_ref.shape)        # lane-dense store


def _ceil_to(x, m):
    return ((x + m - 1) // m) * m


def bce_with_logits_loss(output, target, num_class_list,
                         *, target_tile_bytes=4 * 1024 * 1024):
    """output, target: [N, C]; num_class_list: length-C per-class weights."""
    assert output.ndim == 2 and output.shape == target.shape
    n, c = output.shape
    assert len(num_class_list) == c

    itemsize = jnp.dtype(output.dtype).itemsize
    # Bytes streamed per grid step = 2 tensors * c * tn * itemsize.
    tn_target = max(128, (target_tile_bytes // (2 * c * itemsize)) // 128 * 128)

    n128 = _ceil_to(n, 128)
    if n128 <= tn_target:
        tn, num_parts, steps = n128, 1, 1
    else:
        n_tiles = pl.cdiv(n128, tn_target)
        if n_tiles % 2:
            n_tiles += 1                           # even tile count -> 2-way core split
        tn = _ceil_to(pl.cdiv(n128, n_tiles), 128)
        num_parts, steps = 2, n_tiles // 2
    padded_n = tn * num_parts * steps

    # Lane-dense layout: classes on sublanes, batch on the 128-lane axis.
    x_t = output.T
    y_t = target.T
    pad = padded_n - n
    if pad:
        # x=-1e4, y=0 -> max(x,0)=0, x*y=0, log1p(exp(-1e4))=0: exactly zero loss.
        x_t = jnp.pad(x_t, ((0, 0), (0, pad)), constant_values=-1e4)
        y_t = jnp.pad(y_t, ((0, 0), (0, pad)), constant_values=0)
    w = jnp.asarray(num_class_list, dtype=jnp.float32).reshape(c, 1)

    kernel = functools.partial(_bce_kernel, inv_n=1.0 / n)
    data_map = lambda p, s: (0, p * steps + s)

    out = pl.pallas_call(
        kernel,
        out_shape=jax.ShapeDtypeStruct((num_parts, 1, 128), jnp.float32),
        grid_spec=pltpu.PrefetchScalarGridSpec(
            num_scalar_prefetch=0,
            grid=(num_parts, steps),
            in_specs=[
                pl.BlockSpec((c, tn), data_map),               # logits tile (native dtype)
                pl.BlockSpec((c, tn), data_map),               # target tile (native dtype)
                pl.BlockSpec((c, 1), lambda p, s: (0, 0)),     # weight: stays resident
            ],
            out_specs=pl.BlockSpec((1, 1, 128), lambda p, s: (p, 0, 0)),
            scratch_shapes=[pltpu.VMEM((c, tn), jnp.float32)],  # running f32 accumulator
        ),
        compiler_params=pltpu.CompilerParams(
            dimension_semantics=("parallel", "arbitrary")),
    )(x_t, y_t, w)

    # Sum the per-core partial losses (P of them).
    return jnp.sum(out[:, 0, 0])


def _reference(output, target, num_class_list):
    # Pure-JAX reference mirroring the PyTorch loop exactly.
    x = output.astype(jnp.float32)
    y = target.astype(jnp.float32)
    w = jnp.asarray(num_class_list, dtype=jnp.float32)
    elem = jnp.maximum(x, 0.0) - x * y + jnp.log1p(jnp.exp(-jnp.abs(x)))
    return jnp.sum(w * jnp.mean(elem, axis=0))


if __name__ == "__main__":
    key = jax.random.PRNGKey(0)
    k1, k2, k3, k4 = jax.random.split(key, 4)

    # Case 1: module-sized example (batch=8, num_classes=4) — single tile.
    ncl1 = [1.0, 2.0, 3.0, 4.0]
    out1 = jax.random.normal(k1, (8, 4), dtype=jnp.float32)
    tgt1 = jax.random.bernoulli(k2, 0.5, (8, 4)).astype(jnp.float32)
    loss1 = jax.block_until_ready(bce_with_logits_loss(out1, tgt1, ncl1))
    ref1 = _reference(out1, tgt1, ncl1)
    assert jnp.allclose(loss1, ref1, atol=1e-5, rtol=1e-4), (loss1, ref1)

    # Case 2: exercises the gridded reduction, padding, and the 2-way parallel
    # partial sums (tiny forced tile so the multi-step path runs at small shapes).
    ncl2 = [0.5, 1.0, 1.5, 2.0, 2.5, 3.0]
    out2 = jax.random.normal(k3, (333, 6), dtype=jnp.float32)
    tgt2 = jax.random.bernoulli(k4, 0.3, (333, 6)).astype(jnp.float32)
    loss2 = jax.block_until_ready(
        bce_with_logits_loss(out2, tgt2, ncl2, target_tile_bytes=4096))
    ref2 = _reference(out2, tgt2, ncl2)
    assert jnp.allclose(loss2, ref2, atol=1e-5, rtol=1e-4), (loss2, ref2)

    print("KERNEL_OK")
</pallas_src>

<mosaic_0001>
module attributes {stable_mosaic.version = 11 : i64} {
  func.func @_bce_kernel(%arg0: i32, %arg1: i32, %arg2: memref<4x128xf32, #tpu.memory_space<vmem>>, %arg3: memref<4x128xf32, #tpu.memory_space<vmem>>, %arg4: memref<4x1xf32, #tpu.memory_space<vmem>>, %arg5: memref<1x1x128xf32, #tpu.memory_space<vmem>>, %arg6: memref<4x128xf32, #tpu.memory_space<vmem>>) attributes {dimension_semantics = [#tpu.dimension_semantics<parallel>, #tpu.dimension_semantics<arbitrary>], iteration_bounds = array<i64: 1, 1>, scalar_prefetch = 0 : i64, scratch_operands = 1 : i64, tpu.core_type = #tpu.core_type<tc>, window_params = [{transform_indices = @transform_0, window_bounds = array<i64: 4, 128>}, {transform_indices = @transform_1, window_bounds = array<i64: 4, 128>}, {pipeline_mode = #tpu.pipeline_mode<synchronous>, transform_indices = @transform_2, window_bounds = array<i64: 4, 1>}, {transform_indices = @transform_3, window_bounds = array<i64: 1, 1, 128>}]} {
    %c0_i32 = arith.constant 0 : i32
    %0 = arith.cmpi eq, %arg1, %c0_i32 : i32
    %1 = arith.extui %0 : i1 to i32
    %c0_i32_0 = arith.constant 0 : i32
    %2 = arith.cmpi ne, %1, %c0_i32_0 : i32
    scf.if %2 {
      %cst_11 = arith.constant 0.000000e+00 : f32
      %21 = vector.broadcast %cst_11 : f32 to vector<4x128xf32>
      %c0_12 = arith.constant 0 : index
      %c0_13 = arith.constant 0 : index
      %22 = vector.load %arg6[%c0_12, %c0_13] : memref<4x128xf32, #tpu.memory_space<vmem>>, vector<4x128xf32>
      tpu.vector_store %arg6[%c0_12, %c0_13], %21 {strides = array<i32>} : memref<4x128xf32, #tpu.memory_space<vmem>>, vector<4x128xf32>,
    } else {
    }
    %c0 = arith.constant 0 : index
    %c0_1 = arith.constant 0 : index
    %3 = vector.load %arg2[%c0, %c0_1] : memref<4x128xf32, #tpu.memory_space<vmem>>, vector<4x128xf32>
    %c0_2 = arith.constant 0 : index
    %c0_3 = arith.constant 0 : index
    %4 = vector.load %arg3[%c0_2, %c0_3] : memref<4x128xf32, #tpu.memory_space<vmem>>, vector<4x128xf32>
    %c0_4 = arith.constant 0 : index
    %c0_5 = arith.constant 0 : index
    %5 = vector.load %arg6[%c0_4, %c0_5] : memref<4x128xf32, #tpu.memory_space<vmem>>, vector<4x128xf32>
    %cst = arith.constant 0.000000e+00 : f32
    %6 = vector.broadcast %cst : f32 to vector<4x128xf32>
    %7 = arith.maximumf %3, %6 : vector<4x128xf32>
    %8 = arith.mulf %3, %4 : vector<4x128xf32>
    %9 = arith.subf %7, %8 : vector<4x128xf32>
    %10 = math.absf %3 : vector<4x128xf32>
    %cst_6 = arith.constant 0.000000e+00 : f32
    %11 = vector.broadcast %cst_6 : f32 to vector<4x128xf32>
    %12 = arith.subf %11, %10 : vector<4x128xf32>
    %13 = math.exp %12 : vector<4x128xf32>
    %14 = math.log1p %13 : vector<4x128xf32>
    %15 = arith.addf %9, %14 : vector<4x128xf32>
    %16 = arith.addf %5, %15 : vector<4x128xf32>
    %c0_7 = arith.constant 0 : index
    %c0_8 = arith.constant 0 : index
    %17 = vector.load %arg6[%c0_7, %c0_8] : memref<4x128xf32, #tpu.memory_space<vmem>>, vector<4x128xf32>
    tpu.vector_store %arg6[%c0_7, %c0_8], %16 {strides = array<i32>} : memref<4x128xf32, #tpu.memory_space<vmem>>, vector<4x128xf32>,
    %c0_i32_9 = arith.constant 0 : i32
    %18 = arith.cmpi eq, %arg1, %c0_i32_9 : i32
    %19 = arith.extui %18 : i1 to i32
    %c0_i32_10 = arith.constant 0 : i32
    %20 = arith.cmpi ne, %19, %c0_i32_10 : i32
    scf.if %20 {
      %c0_11 = arith.constant 0 : index
      %c0_12 = arith.constant 0 : index
      %21 = vector.load %arg6[%c0_11, %c0_12] : memref<4x128xf32, #tpu.memory_space<vmem>>, vector<4x128xf32>
      %cst_13 = arith.constant dense<0.000000e+00> : vector<4xf32>
      %22 = vector.multi_reduction <add>, %21, %cst_13 [1] : vector<4x128xf32> to vector<4xf32>
      %23 = vector.shape_cast %22 : vector<4xf32> to vector<4x1xf32>
      %c0_14 = arith.constant 0 : index
      %c0_15 = arith.constant 0 : index
      %24 = vector.load %arg4[%c0_14, %c0_15] : memref<4x1xf32, #tpu.memory_space<vmem>>, vector<4x1xf32>
      %25 = arith.mulf %24, %23 : vector<4x1xf32>
      %26 = vector.shape_cast %25 : vector<4x1xf32> to vector<1x4x1xf32>
      %cst_16 = arith.constant dense<0.000000e+00> : vector<1xf32>
      %27 = vector.multi_reduction <add>, %26, %cst_16 [1, 2] : vector<1x4x1xf32> to vector<1xf32>
      %28 = vector.shape_cast %27 : vector<1xf32> to vector<1x1x1xf32>
      %29 = vector.extract %28[0, 0, 0] : f32 from vector<1x1x1xf32>
      %cst_17 = arith.constant 1.250000e-01 : f32
      %30 = arith.mulf %29, %cst_17 : f32
      %31 = vector.broadcast %30 : f32 to vector<1x1x128xf32>
      %c0_18 = arith.constant 0 : index
      %c0_19 = arith.constant 0 : index
      %c0_20 = arith.constant 0 : index
      %32 = vector.load %arg5[%c0_18, %c0_19, %c0_20] : memref<1x1x128xf32, #tpu.memory_space<vmem>>, vector<1x1x128xf32>
      tpu.vector_store %arg5[%c0_18, %c0_19, %c0_20], %31 {strides = array<i32>} : memref<1x1x128xf32, #tpu.memory_space<vmem>>, vector<1x1x128xf32>,
    } else {
    }
    return
  }
  func.func @transform_0(%arg0: i32, %arg1: i32) -> (i32, i32) {
    %c1_i32 = arith.constant 1 : i32
    %0 = arith.muli %arg0, %c1_i32 : i32
    %1 = arith.addi %0, %arg1 : i32
    %c0_i32 = arith.constant 0 : i32
    %c0_i32_0 = arith.constant 0 : i32
    return %c0_i32, %1 : i32, i32
  }
  func.func @transform_1(%arg0: i32, %arg1: i32) -> (i32, i32) {
    %c1_i32 = arith.constant 1 : i32
    %0 = arith.muli %arg0, %c1_i32 : i32
    %1 = arith.addi %0, %arg1 : i32
    %c0_i32 = arith.constant 0 : i32
    %c0_i32_0 = arith.constant 0 : i32
    return %c0_i32, %1 : i32, i32
  }
  func.func @transform_2(%arg0: i32, %arg1: i32) -> (i32, i32) {
    %c0_i32 = arith.constant 0 : i32
    %c0_i32_0 = arith.constant 0 : i32
    %c0_i32_1 = arith.constant 0 : i32
    return %c0_i32, %c0_i32_0 : i32, i32
  }
  func.func @transform_3(%arg0: i32, %arg1: i32) -> (i32, i32, i32) {
    %c0_i32 = arith.constant 0 : i32
    %c0_i32_0 = arith.constant 0 : i32
    %c0_i32_1 = arith.constant 0 : i32
    return %arg0, %c0_i32, %c0_i32_0 : i32, i32, i32
  }
}

</mosaic_0001>

<llo_original>
// kernel: tpu_custom_call.1
$region0: #{tpu_custom_call.1}
  #allocation0 [shape = 'u32[]', space=smem, size = 0x4, offset = 0x4, fixed_abs, tag = 'smem constant byte address 0x4 - core index']
  #allocation1 [shape = 'u32[144,128]{1,0:T(1,128)}', space=vmem, size = 0x12000, scoped, tag = 'internal scratch']
  #allocation2 [shape = 'f32[4,128]{1,0:T(4,128)}', space=vmem, size = 0x800, scoped, tag = 'scratch operand']
  %s0 = inlined_call_operand.vmem [shape: f32[4,128], index: 0, kind: input, shape index: {}]
  %s1 = inlined_call_operand.hbm [shape: f32[4,128], index: 1, kind: input, shape index: {}]
  %s2 = inlined_call_operand.vmem [shape: f32[4,1], index: 2, kind: input, shape index: {}]
  %s3 = inlined_call_operand.hbm [shape: f32[1,1,128], index: 3, kind: output, shape index: {}]
  %s4 = sld [smem:[#allocation0]]
  $region34: #{tpu_custom_call.1} parent=0
    _
  %s6 = ssub.s32 1, %s4
  %s7 = scalar_select 0, %s6, %s4
  $region1: #{tpu_custom_call.1} parent=0
    #allocation3 [shape = 'u8[2048]{0}', space=vmem, size = 0x800, scoped, tag = 'input window, operand 1, single buffered']
    #allocation4 [shape = 's32[1]{0}', space=sflag, size = 0x4, scoped, tag = 'scoped memory for tpu_custom_call.1']
    #allocation5 [shape = 's32[1]{0}', space=sflag, size = 0x4, scoped, tag = 'scoped memory for tpu_custom_call.1']
    #allocation6 [shape = 'u8[512]{0}', space=vmem, size = 0x400, scoped, tag = 'output window, operand 0, single buffered']
    %8 = vsyncpa [#allocation4], 0
    %9 = vsyncpa [#allocation5], 0
    // Predicated region
    $region2: #{tpu_custom_call.1} parent=1 // pred_check
      _
    $region3: #{tpu_custom_call.1} parent=1 // pred_check_branch
      %11 = sbr.rel (0) target = $region5
    $region4: #{tpu_custom_call.1} parent=1 // pred_region
      %s12 = sadd.s32 0, 0
      %p13 = scmp.lt.s32.totalorder %s12, 0
      %s14 = scalar_select %p13, %s12, 0
      %s15 = smul.addr %s14, 4
      %s16 = scalar_lea.vmem %s0, %s15
      %s17 = sadd.s32 0, 0
    $region5: #{tpu_custom_call.1} parent=1 // pred_fallthru
      _
    // Predicated region
    $region6: #{tpu_custom_call.1} parent=1 // pred_check
      _
    $region7: #{tpu_custom_call.1} parent=1 // pred_check_branch
      %19 = sbr.rel (0) target = $region9
    $region8: #{tpu_custom_call.1} parent=1 // pred_region
      %s20 = sadd.s32 0, 0
      %s22 = ssub.s32 64, 64
      %23 = vsyncadd [#allocation4], %s22
      %s24 = smul.addr %s20, 64
      %s25 = scalar_lea.hbm %s1, %s24
      %s27 = sshll.u32 [#allocation3], 4
      %s28 = int_to_ptr.vmem [resolvable:$true] %s27
      %30 = dma.hbm_to_vmem [thread:$0]  %s25, 64, %s28, [#allocation4]
    $region9: #{tpu_custom_call.1} parent=1 // pred_fallthru
      _
    // Predicated region
    $region10: #{tpu_custom_call.1} parent=1 // pred_check
      _
    $region11: #{tpu_custom_call.1} parent=1 // pred_check_branch
      %32 = sbr.rel (0) target = $region13
    $region12: #{tpu_custom_call.1} parent=1 // pred_region
      _
    $region13: #{tpu_custom_call.1} parent=1 // pred_fallthru
      _
    // Predicated region
    $region14: #{tpu_custom_call.1} parent=1 // pred_check
      _
    $region15: #{tpu_custom_call.1} parent=1 // pred_check_branch
      %34 = sbr.rel (0) target = $region17
    $region16: #{tpu_custom_call.1} parent=1 // pred_region
      %35 = dma.done [#allocation4], 64
    $region17: #{tpu_custom_call.1} parent=1 // pred_fallthru
      _
    %s36 = sadd.s32 0, 0
    %p37 = scmp.lt.s32.totalorder %s36, 0
    %s38 = scalar_select %p37, %s36, 0
    %s39 = smul.addr %s38, 4
    %s40 = scalar_lea.vmem %s0, %s39
    %s41 = sadd.s32 0, 0
    %p42 = scmp.lt.s32.totalorder %s41, 0
    %s43 = scalar_select %p42, %s41, 0
    %s44 = smul.addr %s43, 4
    %s45 = scalar_lea.vmem %s0, %s44
    %s46 = sadd.s32 0, 0
    %s47 = sadd.s32 0, 0
    %p48 = scmp.eq.s32.totalorder 0, 0
    // Predicated region
    $region18: #{tpu_custom_call.1} parent=1 // pred_check
      %p49 = pneg %p48
    $region19: #{tpu_custom_call.1} parent=1 // pred_check_branch
      %51 = sbr.rel (%p49) target = $region21
    $region20: #{tpu_custom_call.1} parent=1 // pred_region
      %52 = vst [vmem:[#allocation2] sm:$0xf] 0.0
    $region21: #{tpu_custom_call.1} parent=1 // pred_fallthru
      _
    %v53 = vld [vmem:[%s45] sm:$0xf]
    %v54 = vld [vmem:[#allocation3] sm:$0xf]
    %v55 = vld [vmem:[#allocation2] sm:$0xf]
    %v56 = vmax.f32 %v53, 0.0
    %v57 = vmul.f32 %v53, %v54
    %v58 = vsub.f32 %v56, %v57
    %v59 = vand.u32 2147483647, %v53
    %v60 = vsub.f32 0.0, %v59
    %v61 = vmul.f32 %v60, 1.442695
    %v62 = vpow.pop %v61
    %v63 = vadd.f32 %v62, 1.0
    %v64 = vlog2.pop %v63
    %v65 = vmul.f32 %v64, 0.6931472
    %v66 = vmul.f32 -0.5, %v62
    %v67 = vadd.f32 %v66, 1.0
    %v68 = vmul.f32 %v67, %v62
    %v69 = vand.u32 2147483647, %v62
    %vm70 = vcmp.lt.f32.partialorder %v69, 0.0004427343
    %v71 = vsel %vm70, %v68, %v65
    %v72 = vadd.f32 %v58, %v71
    %v73 = vadd.f32 %v55, %v72
    %74 = vst [vmem:[#allocation2] sm:$0xf] %v73
    // Predicated region
    $region22: #{tpu_custom_call.1} parent=1 // pred_check
      %p75 = pneg %p48
    $region23: #{tpu_custom_call.1} parent=1 // pred_check_branch
      %77 = sbr.rel (%p75) target = $region25
    $region24: #{tpu_custom_call.1} parent=1 // pred_region
      %v78 = vld [vmem:[#allocation2] sm:$0xf]
      %vm79 = vcmask 1043456
      %v80 = vsel %vm79, %v78, 0.0
      %81 = vadd.xlane.f32.xlu0 %v80
      %v82 = vpop.xlane.xlu0 %81
      %v83 = vld [vmem:[%s2] sm:$0xf]
      %v84 = vmul.f32 %v83, %v82
      %vm85 = vcmask 3072
      %v86 = vsel %vm85, %v84, 0.0
      %87 = vadd.xlane.f32.xlu0 %v86
      %v88 = vpop.xlane.xlu0 %87
      %v89 = vrot.slane %v88, 4
      %v90 = vadd.f32 %v88, %v89
      %v91 = vrot.slane %v90, 2
      %v92 = vadd.f32 %v90, %v91
      %v93 = vrot.slane %v92, 1
      %v94 = vadd.f32 %v92, %v93
      %s95 = vtos %v94
      %s96 = smul.f32 %s95, 0.125
      %v97 = vstv %s96
      %98 = vst [vmem:[#allocation6] sm:$0x1] %v97
    $region25: #{tpu_custom_call.1} parent=1 // pred_fallthru
      _
    // Predicated region
    $region26: #{tpu_custom_call.1} parent=1 // pred_check
      _
    $region27: #{tpu_custom_call.1} parent=1 // pred_check_branch
      %100 = sbr.rel (0) target = $region29
    $region28: #{tpu_custom_call.1} parent=1 // pred_region
      %s102 = ssub.s32 16, 16
      %103 = vsyncadd [#allocation5], %s102
      %s105 = sshll.u32 [#allocation6], 4
      %s106 = int_to_ptr.vmem [resolvable:$true] %s105
      %108 = dma.vmem_to_hbm [thread:$0]  %s106, 16, %s3, [#allocation5]
    $region29: #{tpu_custom_call.1} parent=1 // pred_fallthru
      _
    // Predicated region
    $region30: #{tpu_custom_call.1} parent=1 // pred_check
      _
    $region31: #{tpu_custom_call.1} parent=1 // pred_check_branch
      %110 = sbr.rel (0) target = $region33
    $region32: #{tpu_custom_call.1} parent=1 // pred_region
      %111 = dma.done [#allocation5], 16
    $region33: #{tpu_custom_call.1} parent=1 // pred_fallthru
      _
    %112 = vsyncpa [#allocation4], 1
    %113 = vsyncpa [#allocation5], 1

</llo_original>
